<compile_context>
chip_gen: v7x
topology: tpu7x:2x2x1
jax: 0.10.0
libtpu: 0.0.40
codegen_flags: <defaults>
</compile_context>

<pallas_src>
import functools

import jax
import jax.numpy as jnp
import numpy as np
from jax.experimental import pallas as pl
from jax.experimental.pallas import tpu as pltpu


_SLAB = 128                 # one lane group per edge for the reflection fix-up
_VMEM_FOOTPRINT_MULT = 5    # 2x double-buffered input + 2x output + roll/where temps


def _phase_shuffle_kernel(k_ref, x_ref, o_ref, *, max_shift, slab):
    """One (tc, T) block: roll along time by the per-batch shift, fix the edges."""
    b = pl.program_id(0)
    k = k_ref[b]                       # per-batch shift, scalar in SMEM
    x = x_ref[...]                     # (tc, T) block, full time axis
    T = x.shape[-1]

    # Bulk move: cyclic lane rotation on the XLU, y[t] = x[(t - k) mod T].
    shift = jnp.where(k < 0, k + T, k)          # non-negative rotate amount
    y = pltpu.roll(x, shift=shift, axis=1)
    o_ref[...] = y                     # lane-dense bulk store; edges fixed below

    # Reflection fix-up: only the <= max_shift wrapped columns at each edge are
    # wrong.  Keep all iota/compare/select work on narrow edge slabs so the VPU
    # cost is O(max_shift * 128) instead of O(max_shift * T); skip entirely for
    # the zero-shift batches.
    @pl.when(k != 0)
    def _fixup():
        if slab is None:
            # Fallback (short T or very large shift_factor): full-width selects.
            t_idx = jax.lax.broadcasted_iota(jnp.int32, x.shape, 1)
            fixed = y
            for d in range(1, max_shift + 1):
                fixed = jnp.where(t_idx == (k - d), x[:, d:d + 1], fixed)
                fixed = jnp.where(t_idx == (T - 1 + k + d),
                                  x[:, T - 1 - d:T - d], fixed)
            o_ref[...] = fixed
        else:
            tc = x.shape[0]
            # Left slab holds every correction for k > 0 (output cols 0..k-1).
            left = y[:, :slab]
            lt = jax.lax.broadcasted_iota(jnp.int32, (tc, slab), 1)
            # Right slab holds every correction for k < 0 (output cols T+k..T-1).
            right = y[:, T - slab:]
            rt = lt + (T - slab)
            for d in range(1, max_shift + 1):
                # k > 0: output column (k - d) reflects x[:, d].
                left = jnp.where(lt == (k - d), x[:, d:d + 1], left)
                # k < 0: output column (T - 1 + k + d) reflects x[:, T - 1 - d].
                right = jnp.where(rt == (T - 1 + k + d),
                                  x[:, T - 1 - d:T - d], right)
            # Two narrow, statically-offset stores (unmasked vst when T % 128 == 0).
            o_ref[:, :slab] = left
            o_ref[:, T - slab:] = right


def _sublane_multiple(itemsize):
    """Sublane tile multiple per dtype: 8 (f32), 16 (bf16/f16), 32 (int8/fp8)."""
    return 8 * (4 // max(1, int(itemsize)))


def _device_block_budget_bytes():
    """Per-block byte budget; ~5x footprint must stay inside scoped/physical VMEM."""
    try:
        kind = jax.devices()[0].device_kind.lower()
    except Exception:  # CPU / interpret fallback
        kind = ""
    if "v5" in kind:
        return 3 << 20      # ~15 MiB footprint, under v5e's 16 MiB scoped default
    if "v6" in kind:
        return 6 << 20      # ~30 MiB footprint, under v6e's 32 MiB scoped default
    return 4 << 20          # v7x (64 MiB physical VMEM) and anything unrecognized


def _choose_c_tile(B, C, T, itemsize, budget_bytes=None):
    """Largest channel tile (dtype-aware sublane multiple, dividing C) that fits."""
    if budget_bytes is None:
        budget_bytes = _device_block_budget_bytes()
    sub = _sublane_multiple(itemsize)
    cands = [c for c in range(sub, C + 1, sub) if C % c == 0]
    if not cands:
        # C has no divisor that is a sublane multiple; only the full-C block is
        # legal for the BlockSpec (last-two-dims rule).  May be large for huge
        # C*T, but that is a compile-time VMEM limit, not a correctness issue.
        return C
    fitting = [c for c in cands if c * T * itemsize <= budget_bytes]
    if not fitting:
        fitting = [min(cands)]
    # Megacore: v7x has 2 TensorCores -- make sure the grid has >= 2 steps when
    # B == 1 so both cores stream from HBM.
    if B == 1:
        multi = [c for c in fitting if C // c >= 2]
        if multi:
            return max(multi)
    return max(fitting)


def phase_shuffle(x, shifts, shift_factor, c_tile=None):
    """Apply per-batch phase shift `shifts` (int32 in [-n, n]) to x (B, C, T)."""
    B, C, T = x.shape
    if shift_factor == 0:
        return x
    assert shift_factor <= T - 1, "reflection padding requires |shift| <= T - 1"
    assert shifts.shape == (B,)

    itemsize = x.dtype.itemsize
    sub = _sublane_multiple(itemsize)
    tc = c_tile if c_tile is not None else _choose_c_tile(B, C, T, itemsize)
    assert C % tc == 0 and (tc == C or tc % sub == 0), (tc, C, sub)

    # Edge-slab fix-up is valid iff both slabs are disjoint and cover all
    # wrapped columns; otherwise fall back to the full-width select path.
    slab = _SLAB if (shift_factor <= _SLAB and T >= 2 * _SLAB) else None

    block_bytes = tc * T * itemsize
    vmem_limit = int(min(48 << 20,            # <= ~48 MiB: safe on v7x's 64 MiB VMEM
                         max(32 << 20, _VMEM_FOOTPRINT_MULT * block_bytes)))

    kernel = functools.partial(_phase_shuffle_kernel,
                               max_shift=int(shift_factor), slab=slab)
    return pl.pallas_call(
        kernel,
        out_shape=jax.ShapeDtypeStruct((B, C, T), x.dtype),
        grid_spec=pltpu.PrefetchScalarGridSpec(
            num_scalar_prefetch=1,
            grid=(B, C // tc),
            in_specs=[pl.BlockSpec((None, tc, T), lambda b, c, k_ref: (b, c, 0))],
            out_specs=pl.BlockSpec((None, tc, T), lambda b, c, k_ref: (b, c, 0)),
        ),
        compiler_params=pltpu.CompilerParams(
            dimension_semantics=("parallel", "parallel"),
            vmem_limit_bytes=vmem_limit),
    )(shifts.astype(jnp.int32), x)


def phase_shuffle_forward(x, shift_factor, key):
    """Equivalent of PhaseShuffle(shift_factor).forward(x)."""
    if shift_factor == 0:
        return x
    # PyTorch: random_(0, 2n+1) - n  ==  uniform int in [-n, n]
    # TODO(synk): uses jax.random instead of torch's CPU RNG stream (same distribution).
    shifts = jax.random.randint(
        key, (x.shape[0],), -shift_factor, shift_factor + 1, dtype=jnp.int32)
    return phase_shuffle(x, shifts, shift_factor)


def _reference(x, shifts):
    # numpy reference reproducing F.pad(..., mode='reflect') semantics
    x = np.asarray(x)
    shifts = np.asarray(shifts)
    B, C, T = x.shape
    out = np.empty_like(x)
    for b in range(B):
        k = int(shifts[b])
        idx = np.abs(np.arange(T) - k)
        idx = np.where(idx > T - 1, 2 * (T - 1) - idx, idx)
        out[b] = x[b][:, idx]
    return out


if __name__ == "__main__":
    key = jax.random.PRNGKey(0)
    kx, kx2, kx3, kf = jax.random.split(key, 4)

    # Case 1: edge-slab fix-up path (T >= 256), f32, explicit +/- shifts.
    B, C, T = 2, 8, 512
    shift_factor = 2
    x = jax.random.normal(kx, (B, C, T), dtype=jnp.float32)
    shifts = jnp.array([2, -1], dtype=jnp.int32)
    y = jax.block_until_ready(phase_shuffle(x, shifts, shift_factor))
    assert y.shape == x.shape
    # Pure data movement -> exact equality with the reference.
    np.testing.assert_allclose(np.asarray(y), _reference(x, shifts), rtol=0, atol=0)

    # Case 2: short-T full-width fallback path, includes k == 0 (pl.when skip).
    B2, C2, T2 = 4, 8, 128
    sf2 = 3
    x2 = jax.random.normal(kx2, (B2, C2, T2), dtype=jnp.float32)
    shifts2 = jnp.array([3, 0, -3, 1], dtype=jnp.int32)
    y2 = jax.block_until_ready(phase_shuffle(x2, shifts2, sf2))
    np.testing.assert_allclose(np.asarray(y2), _reference(x2, shifts2), rtol=0, atol=0)

    # Case 3: bf16 with dtype-aware (16-sublane) channel tiling and a C-tiled grid.
    B3, C3, T3 = 2, 32, 256
    sf3 = 2
    x3 = jax.random.normal(kx3, (B3, C3, T3), dtype=jnp.float32).astype(jnp.bfloat16)
    shifts3 = jnp.array([-2, 1], dtype=jnp.int32)
    y3 = jax.block_until_ready(phase_shuffle(x3, shifts3, sf3, c_tile=16))
    np.testing.assert_allclose(
        np.asarray(y3.astype(jnp.float32)),
        _reference(np.asarray(x3.astype(jnp.float32)), shifts3), rtol=0, atol=0)

    # Module-style forward (random shifts drawn with jax.random).
    y4 = jax.block_until_ready(phase_shuffle_forward(x, shift_factor, kf))
    assert y4.shape == x.shape

    print("KERNEL_OK")
</pallas_src>

<mosaic_0001>
module attributes {stable_mosaic.version = 11 : i64} {
  func.func @_phase_shuffle_kernel(%arg0: i32, %arg1: i32, %arg2: memref<2xi32, #tpu.memory_space<smem>>, %arg3: memref<1x8x512xf32, #tpu.memory_space<vmem>>, %arg4: memref<1x8x512xf32, #tpu.memory_space<vmem>>) attributes {dimension_semantics = [#tpu.dimension_semantics<parallel>, #tpu.dimension_semantics<parallel>], iteration_bounds = array<i64: 2, 1>, scalar_prefetch = 1 : i64, scratch_operands = 0 : i64, tpu.core_type = #tpu.core_type<tc>, window_params = [{transform_indices = @transform_0, window_bounds = array<i64: 1, 8, 512>}, {transform_indices = @transform_1, window_bounds = array<i64: 1, 8, 512>}]} {
    %0 = arith.index_cast %arg0 : i32 to index
    %1 = memref.load %arg2[%0] : memref<2xi32, #tpu.memory_space<smem>>
    %c0 = arith.constant 0 : index
    %c0_0 = arith.constant 0 : index
    %c0_1 = arith.constant 0 : index
    %2 = vector.load %arg3[%c0, %c0_0, %c0_1] : memref<1x8x512xf32, #tpu.memory_space<vmem>>, vector<1x8x512xf32>
    %3 = vector.shape_cast %2 : vector<1x8x512xf32> to vector<8x512xf32>
    %c0_i32 = arith.constant 0 : i32
    %4 = arith.cmpi slt, %1, %c0_i32 : i32
    %c512_i32 = arith.constant 512 : i32
    %5 = arith.addi %1, %c512_i32 : i32
    %6 = arith.select %4, %5, %1 : i32
    %7 = tpu.dynamic_rotate %3 by %6 dim 1 : vector<8x512xf32>, i32 -> vector<8x512xf32>
    %c0_2 = arith.constant 0 : index
    %c0_3 = arith.constant 0 : index
    %c0_4 = arith.constant 0 : index
    %8 = vector.load %arg4[%c0_2, %c0_3, %c0_4] : memref<1x8x512xf32, #tpu.memory_space<vmem>>, vector<1x8x512xf32>
    %9 = vector.shape_cast %8 : vector<1x8x512xf32> to vector<8x512xf32>
    %10 = vector.shape_cast %7 : vector<8x512xf32> to vector<1x8x512xf32>
    tpu.vector_store %arg4[%c0_2, %c0_3, %c0_4], %10 {strides = array<i32>} : memref<1x8x512xf32, #tpu.memory_space<vmem>>, vector<1x8x512xf32>,
    %c0_i32_5 = arith.constant 0 : i32
    %11 = arith.cmpi ne, %1, %c0_i32_5 : i32
    %12 = arith.extui %11 : i1 to i32
    %c0_i32_6 = arith.constant 0 : i32
    %13 = arith.cmpi ne, %12, %c0_i32_6 : i32
    scf.if %13 {
      %14 = vector.extract_strided_slice %7 {offsets = [0, 0], sizes = [8, 128], strides = [1, 1]} : vector<8x512xf32> to vector<8x128xf32>
      %15 = tpu.iota {dimensions = array<i32: 1>} : vector<8x128xi32>
      %16 = vector.extract_strided_slice %7 {offsets = [0, 384], sizes = [8, 128], strides = [1, 1]} : vector<8x512xf32> to vector<8x128xf32>
      %c384_i32 = arith.constant 384 : i32
      %17 = vector.broadcast %c384_i32 : i32 to vector<8x128xi32>
      %18 = arith.addi %15, %17 : vector<8x128xi32>
      %c1_i32 = arith.constant 1 : i32
      %19 = arith.subi %1, %c1_i32 : i32
      %20 = vector.broadcast %19 : i32 to vector<8x128xi32>
      %21 = arith.cmpi eq, %15, %20 : vector<8x128xi32>
      %22 = vector.extract_strided_slice %3 {offsets = [0, 1], sizes = [8, 1], strides = [1, 1]} : vector<8x512xf32> to vector<8x1xf32>
      %23 = vector.shape_cast %22 : vector<8x1xf32> to vector<8x1xf32>
      %24 = vector.broadcast %23 : vector<8x1xf32> to vector<8x128xf32>
      %25 = arith.select %21, %24, %14 : vector<8x128xi1>, vector<8x128xf32>
      %c511_i32 = arith.constant 511 : i32
      %26 = arith.addi %c511_i32, %1 : i32
      %c1_i32_7 = arith.constant 1 : i32
      %27 = arith.addi %26, %c1_i32_7 : i32
      %28 = vector.broadcast %27 : i32 to vector<8x128xi32>
      %29 = arith.cmpi eq, %18, %28 : vector<8x128xi32>
      %30 = vector.extract_strided_slice %3 {offsets = [0, 510], sizes = [8, 1], strides = [1, 1]} : vector<8x512xf32> to vector<8x1xf32>
      %31 = vector.shape_cast %30 : vector<8x1xf32> to vector<8x1xf32>
      %32 = vector.broadcast %31 : vector<8x1xf32> to vector<8x128xf32>
      %33 = arith.select %29, %32, %16 : vector<8x128xi1>, vector<8x128xf32>
      %c2_i32 = arith.constant 2 : i32
      %34 = arith.subi %1, %c2_i32 : i32
      %35 = vector.broadcast %34 : i32 to vector<8x128xi32>
      %36 = arith.cmpi eq, %15, %35 : vector<8x128xi32>
      %37 = vector.extract_strided_slice %3 {offsets = [0, 2], sizes = [8, 1], strides = [1, 1]} : vector<8x512xf32> to vector<8x1xf32>
      %38 = vector.shape_cast %37 : vector<8x1xf32> to vector<8x1xf32>
      %39 = vector.broadcast %38 : vector<8x1xf32> to vector<8x128xf32>
      %40 = arith.select %36, %39, %25 : vector<8x128xi1>, vector<8x128xf32>
      %c511_i32_8 = arith.constant 511 : i32
      %41 = arith.addi %c511_i32_8, %1 : i32
      %c2_i32_9 = arith.constant 2 : i32
      %42 = arith.addi %41, %c2_i32_9 : i32
      %43 = vector.broadcast %42 : i32 to vector<8x128xi32>
      %44 = arith.cmpi eq, %18, %43 : vector<8x128xi32>
      %45 = vector.extract_strided_slice %3 {offsets = [0, 509], sizes = [8, 1], strides = [1, 1]} : vector<8x512xf32> to vector<8x1xf32>
      %46 = vector.shape_cast %45 : vector<8x1xf32> to vector<8x1xf32>
      %47 = vector.broadcast %46 : vector<8x1xf32> to vector<8x128xf32>
      %48 = arith.select %44, %47, %33 : vector<8x128xi1>, vector<8x128xf32>
      %c0_10 = arith.constant 0 : index
      %c0_11 = arith.constant 0 : index
      %c0_12 = arith.constant 0 : index
      %49 = vector.load %arg4[%c0_10, %c0_11, %c0_12] : memref<1x8x512xf32, #tpu.memory_space<vmem>>, vector<1x8x128xf32>
      %50 = vector.shape_cast %49 : vector<1x8x128xf32> to vector<8x128xf32>
      %51 = vector.shape_cast %40 : vector<8x128xf32> to vector<1x8x128xf32>
      tpu.vector_store %arg4[%c0_10, %c0_11, %c0_12], %51 {strides = array<i32>} : memref<1x8x512xf32, #tpu.memory_space<vmem>>, vector<1x8x128xf32>,
      %c0_13 = arith.constant 0 : index
      %c0_14 = arith.constant 0 : index
      %c384 = arith.constant 384 : index
      %52 = vector.load %arg4[%c0_13, %c0_14, %c384] : memref<1x8x512xf32, #tpu.memory_space<vmem>>, vector<1x8x128xf32>
      %53 = vector.shape_cast %52 : vector<1x8x128xf32> to vector<8x128xf32>
      %54 = vector.shape_cast %48 : vector<8x128xf32> to vector<1x8x128xf32>
      tpu.vector_store %arg4[%c0_13, %c0_14, %c384], %54 {strides = array<i32>} : memref<1x8x512xf32, #tpu.memory_space<vmem>>, vector<1x8x128xf32>,
    } else {
    }
    return
  }
  func.func @transform_0(%arg0: i32, %arg1: i32, %arg2: memref<2xi32, #tpu.memory_space<smem>>) -> (i32, i32, i32) {
    %c0_i32 = arith.constant 0 : i32
    %c0_i32_0 = arith.constant 0 : i32
    return %arg0, %arg1, %c0_i32 : i32, i32, i32
  }
  func.func @transform_1(%arg0: i32, %arg1: i32, %arg2: memref<2xi32, #tpu.memory_space<smem>>) -> (i32, i32, i32) {
    %c0_i32 = arith.constant 0 : i32
    %c0_i32_0 = arith.constant 0 : i32
    return %arg0, %arg1, %c0_i32 : i32, i32, i32
  }
}

</mosaic_0001>

<llo_original>
// kernel: tpu_custom_call.1
$region0: #{tpu_custom_call.1}
  #allocation0 [shape = 'u32[]', space=smem, size = 0x4, offset = 0x4, fixed_abs, tag = 'smem constant byte address 0x4 - core index']
  #allocation1 [shape = 'u32[144,128]{1,0:T(1,128)}', space=vmem, size = 0x12000, scoped, tag = 'internal scratch']
  #allocation2 [shape = 's32[1]{0}', space=sflag, size = 0x4, scoped, tag = 'scoped memory for tpu_custom_call.1']
  #allocation3 [shape = 'u8[512]{0}', space=smem, size = 0x200, scoped, tag = 'prefetched SMEM operand 0']
  %s0 = inlined_call_operand.hbm [shape: s32[2], index: 0, kind: input, shape index: {}]
  %s1 = inlined_call_operand.hbm [shape: f32[2,8,512], index: 1, kind: input, shape index: {}]
  %s2 = inlined_call_operand.hbm [shape: f32[2,8,512], index: 2, kind: output, shape index: {}]
  %s3 = sld [smem:[#allocation0]]
  $region45: #{tpu_custom_call.1} parent=0
    _
  %s5 = ssub.s32 1, %s3
  %s6 = scalar_select 0, %s5, %s3
  %8 = dma.hbm_to_smem %s0, 16, [#allocation3], [#allocation2]
  %9 = dma.done [#allocation2], 16
  %10 = sfence
  $region1: #{tpu_custom_call.1} parent=0
    #allocation4 [shape = 'u8[32768]{0}', space=vmem, size = 0x8000, scoped, tag = 'input window, operand 1']
    #allocation5 [shape = 's32[2]{0}', space=sflag, size = 0x8, scoped, tag = 'scoped memory for tpu_custom_call.1']
    #allocation6 [shape = 's32[2]{0}', space=sflag, size = 0x8, scoped, tag = 'scoped memory for tpu_custom_call.1']
    #allocation7 [shape = 'u8[32768]{0}', space=vmem, size = 0x8000, scoped, tag = 'output window, operand 0']
    %11 = vsyncpa [#allocation5], 0
    %s12 = scalar_lea.sflag [#allocation5], 1
    %13 = vsyncpa %s12, 0
    %14 = vsyncpa [#allocation6], 0
    %s15 = scalar_lea.sflag [#allocation6], 1
    %16 = vsyncpa %s15, 0
    loop: start=0, step=1, limit=4
    $region2: #{tpu_custom_call.1} parent=1 // loop_pre_header
      _
    $region3: #{tpu_custom_call.1} parent=1 // loop_header
      %s18 = sphi 0, %s22
      %p19 = scmp.ge.s32.totalorder %s18, 4
      %s25 = sphi 0, %s37
      %s26 = sphi 0, %s33
      %s27 = sphi 0, %s25
      %s28 = sphi 0, %s26
      %s29 = sphi 0, %s27
      %s30 = sphi 0, %s28
      %s42 = sphi 0, %s44
      %s45 = sphi 0, %s42
      %s46 = sphi 0, %s45
      %s62 = sphi 0, %s46
      %s70 = sphi 0, %s72
      %s73 = sphi 0, %s70
      %s74 = sphi 0, %s73
      %s90 = sphi 0, %s74
    $region4: #{tpu_custom_call.1} parent=1 // loop_header_branch
      %21 = sbr.rel (%p19) target = $region8
    $region5: #{tpu_custom_call.1} parent=1 // loop_body
      %s23 = ssub.s32 %s18, 1
      %s24 = ssub.s32 %s18, 2
      %s31 = sadd.s32 1, %s26
      %p32 = scmp.ge.s32.totalorder %s31, 1
      %s33 = scalar_select %p32, 0, %s31
      %s34 = sadd.s32 1, %s25
      %s35 = scalar_select %p32, %s34, %s25
      %p36 = scmp.ge.s32.totalorder %s35, 2
      %s37 = scalar_select %p36, 0, %s35
      %s38 = ssub.s32 %s25, %s37
      %s39 = ssub.s32 %s26, %s33
      %s40 = sor.u32 %s38, %s39
      %p41 = scmp.eq.s32.totalorder %s40, 0
      %s43 = sadd.s32 %s42, 1
      %s44 = scalar_select %p41, %s42, %s43
      %p47 = pneg %p41
      %p48 = scmp.eq.s32.totalorder %s18, 1
      %p49 = por %p47, %p48
      %p50 = scmp.ne.s32.totalorder %s42, %s45
      %p51 = scmp.eq.s32.totalorder %s18, 0
      %p52 = por %p50, %p51
      %p53 = scmp.ne.s32.totalorder %s42, %s45
      %p54 = scmp.eq.s32.totalorder %s23, 1
      %p55 = por %p53, %p54
      %p56 = scmp.ne.s32.totalorder %s45, %s46
      %p57 = scmp.eq.s32.totalorder %s23, 0
      %p58 = por %p56, %p57
      %p59 = scmp.ne.s32.totalorder %s45, %s46
      %p60 = scmp.eq.s32.totalorder %s24, 1
      %p61 = por %p59, %p60
      %p63 = scmp.ne.s32.totalorder %s46, %s62
      %p64 = scmp.eq.s32.totalorder %s24, 0
      %p65 = por %p63, %p64
      %s66 = ssub.s32 %s25, %s37
      %s67 = ssub.s32 %s26, %s33
      %s68 = sor.u32 %s66, %s67
      %p69 = scmp.eq.s32.totalorder %s68, 0
      %s71 = sadd.s32 %s70, 1
      %s72 = scalar_select %p69, %s70, %s71
      %p75 = pneg %p69
      %p76 = scmp.eq.s32.totalorder %s18, 1
      %p77 = por %p75, %p76
      %p78 = scmp.ne.s32.totalorder %s70, %s73
      %p79 = scmp.eq.s32.totalorder %s18, 0
      %p80 = por %p78, %p79
      %p81 = scmp.ne.s32.totalorder %s70, %s73
      %p82 = scmp.eq.s32.totalorder %s23, 1
      %p83 = por %p81, %p82
      %p84 = scmp.ne.s32.totalorder %s73, %s74
      %p85 = scmp.eq.s32.totalorder %s23, 0
      %p86 = por %p84, %p85
      %p87 = scmp.ne.s32.totalorder %s73, %s74
      %p88 = scmp.eq.s32.totalorder %s24, 1
      %p89 = por %p87, %p88
      %p91 = scmp.ne.s32.totalorder %s74, %s90
      %p92 = scmp.eq.s32.totalorder %s24, 0
      %p93 = por %p91, %p92
      %p94 = scmp.le.s32.totalorder 1, %s18
      %p95 = scmp.lt.s32.totalorder %s18, 3
      %p96 = pnand %p94, %p95
      %p97 = pneg %p96
      // Predicated region
      $region9: #{tpu_custom_call.1} parent=5 // pred_check
        _
      $region10: #{tpu_custom_call.1} parent=5 // pred_check_branch
        %99 = sbr.rel (%p96) target = $region12
      $region11: #{tpu_custom_call.1} parent=5 // pred_region
        %s100 = ssub.s32 %s18, 1
      $region12: #{tpu_custom_call.1} parent=5 // pred_fallthru
        _
      %p101 = scmp.lt.s32.totalorder %s18, 2
      // Predicated region
      $region13: #{tpu_custom_call.1} parent=5 // pred_check
        %p102 = pneg %p101
      $region14: #{tpu_custom_call.1} parent=5 // pred_check_branch
        %104 = sbr.rel (%p102) target = $region16
      $region15: #{tpu_custom_call.1} parent=5 // pred_region
        // Predicated region
        $region17: #{tpu_custom_call.1} parent=15 // pred_check
          %p105 = pneg %p52
        $region18: #{tpu_custom_call.1} parent=15 // pred_check_branch
          %107 = sbr.rel (%p105) target = $region20
        $region19: #{tpu_custom_call.1} parent=15 // pred_region
          %s108 = sand.u32 %s42, 1
          %s109 = scalar_lea.sflag [#allocation5], %s108
          %s110 = sand.u32 %s42, 1
          %s111 = smul.addr %s110, 32
          %s112 = scalar_lea.vmem [#allocation4], %s111
          %s114 = ssub.s32 512, 512
          %115 = vsyncadd %s109, %s114
          %s116 = smul.addr %s26, 4
          %s117 = smul.addr %s25, 4
          %s118 = sadd.s32 %s116, %s117
          %s119 = smul.addr %s118, 128
          %s120 = scalar_lea.hbm %s1, %s119
          %s122 = sshll.u32 %s112, 4
          %s123 = int_to_ptr.vmem [resolvable:$true] %s122
          %125 = dma.hbm_to_vmem [thread:$0]  %s120, 512, %s123, %s109
        $region20: #{tpu_custom_call.1} parent=15 // pred_fallthru
          _
      $region16: #{tpu_custom_call.1} parent=5 // pred_fallthru
        _
      %p126 = scmp.le.s32.totalorder 1, %s18
      %p127 = scmp.lt.s32.totalorder %s18, 3
      %p128 = pnand %p126, %p127
      %p129 = pneg %p128
      // Predicated region
      $region21: #{tpu_custom_call.1} parent=5 // pred_check
        _
      $region22: #{tpu_custom_call.1} parent=5 // pred_check_branch
        %131 = sbr.rel (%p128) target = $region24
      $region23: #{tpu_custom_call.1} parent=5 // pred_region
        %s132 = ssub.s32 %s18, 1
        %s133 = sand.u32 %s45, 1
        %s134 = scalar_lea.sflag [#allocation5], %s133
        %s135 = sand.u32 %s45, 1
        %s136 = smul.addr %s135, 32
        %s137 = scalar_lea.vmem [#allocation4], %s136
        // Predicated region
        $region25: #{tpu_custom_call.1} parent=23 // pred_check
          %p138 = pneg %p58
        $region26: #{tpu_custom_call.1} parent=23 // pred_check_branch
          %140 = sbr.rel (%p138) target = $region28
        $region27: #{tpu_custom_call.1} parent=23 // pred_region
          %141 = dma.done %s134, 512
        $region28: #{tpu_custom_call.1} parent=23 // pred_fallthru
          _
        %s142 = sand.u32 %s45, 1
        %s143 = scalar_lea.sflag [#allocation5], %s142
        %s144 = sand.u32 %s45, 1
        %s145 = smul.addr %s144, 32
        %s146 = scalar_lea.vmem [#allocation4], %s145
        %p147 = pneg %p58
        %p148 = pneg %p55
        %p149 = pneg %p86
        %p150 = pneg %p83
        %s151 = sand.u32 %s73, 1
        %s152 = scalar_lea.sflag [#allocation6], %s151
        %s153 = sand.u32 %s73, 1
        %s154 = smul.addr %s153, 32
        %s155 = scalar_lea.vmem [#allocation7], %s154
        %s156 = sld [smem:[#allocation3 + %s27]]
        %v157 = vld [vmem:[%s137] sm:$0xff]
        %v158 = vld [vmem:[%s137 + $0x8] sm:$0xff]
        %v159 = vld [vmem:[%s137 + $0x10] sm:$0xff]
        %v160 = vld [vmem:[%s137 + $0x18] sm:$0xff]
        %p161 = scmp.lt.s32.totalorder %s156, 0
        %s162 = sadd.s32 %s156, 512
        %s163 = scalar_select %p161, %s162, %s156
        %s164 = sand.u32 %s163, 511
        %s165 = sand.u32 %s164, 127
        %s166 = sshrl.u32 %s164, 7
        %167 = vrot.lane.b32.xlu0 %v157, %s165
        %v168 = vpop.permute.xlu0 %167
        %169 = vrot.lane.b32.xlu0 %v158, %s165
        %v170 = vpop.permute.xlu0 %169
        %171 = vrot.lane.b32.xlu0 %v159, %s165
        %v172 = vpop.permute.xlu0 %171
        %173 = vrot.lane.b32.xlu0 %v160, %s165
        %v174 = vpop.permute.xlu0 %173
        %v175 = vstv %s165
        %v176 = vlaneseq
        %v177 = vand.u32 %v176, 127
        %vm178 = vcmp.lt.s32.totalorder %v177, %v175
        %v179 = vsel %vm178, %v172, %v174
        %v180 = vsel %vm178, %v170, %v172
        %v181 = vsel %vm178, %v168, %v170
        %v182 = vsel %vm178, %v174, %v168
        %s183 = sand.u32 %s166, 1
        %v184 = vstv %s183
        %vm185 = vcmp.ne.s32.totalorder %v184, 0
        %v186 = vsel %vm185, %v179, %v182
        %v187 = vsel %vm185, %v182, %v181
        %v188 = vsel %vm185, %v181, %v180
        %v189 = vsel %vm185, %v180, %v179
        %s190 = sand.u32 %s166, 2
        %v191 = vstv %s190
        %vm192 = vcmp.ne.s32.totalorder %v191, 0
        %v193 = vsel %vm192, %v188, %v186
        %v194 = vsel %vm192, %v189, %v187
        %v195 = vsel %vm192, %v186, %v188
        %v196 = vsel %vm192, %v187, %v189
        %197 = vst [vmem:[%s155] sm:$0xff] %v193
        %198 = vst [vmem:[%s155 + $0x8] sm:$0xff] %v194
        %199 = vst [vmem:[%s155 + $0x10] sm:$0xff] %v195
        %200 = vst [vmem:[%s155 + $0x18] sm:$0xff] %v196
        %p201 = scmp.ne.s32.totalorder %s156, 0
        // Predicated region
        $region29: #{tpu_custom_call.1} parent=23 // pred_check
          %p202 = pneg %p201
        $region30: #{tpu_custom_call.1} parent=23 // pred_check_branch
          %204 = sbr.rel (%p202) target = $region32
        $region31: #{tpu_custom_call.1} parent=23 // pred_region
          %v205 = vadd.s32 %v177, 384
          %s206 = ssub.s32 %s156, 1
          %v207 = vstv %s206
          %vm208 = vcmp.eq.s32.totalorder %v177, %v207
          %210 = vset.pattern.permute.xlu0 1
          %211 = vperm.xlu0 %210, %v157
          %v212 = vpop.permute.xlu0 %211
          %v214 = vsel %vm208, %v212, %v193
          %v215 = vstv %s162
          %vm216 = vcmp.eq.s32.totalorder %v205, %v215
          %218 = vset.pattern.permute.xlu0 126
          %219 = vperm.xlu0 %218, %v160
          %v220 = vpop.permute.xlu0 %219
          %v222 = vsel %vm216, %v220, %v196
          %s223 = ssub.s32 %s156, 2
          %v224 = vstv %s223
          %vm225 = vcmp.eq.s32.totalorder %v177, %v224
          %226 = vset.pattern.permute.xlu0 2
          %227 = vperm.xlu0 %226, %v157
          %v228 = vpop.permute.xlu0 %227
          %v230 = vsel %vm225, %v228, %v214
          %s231 = sadd.s32 %s156, 513
          %v232 = vstv %s231
          %vm233 = vcmp.eq.s32.totalorder %v205, %v232
          %234 = vset.pattern.permute.xlu0 125
          %235 = vperm.xlu0 %234, %v160
          %v236 = vpop.permute.xlu0 %235
          %v238 = vsel %vm233, %v236, %v222
          %239 = vst [vmem:[%s155] sm:$0xff] %v230
          %240 = vst [vmem:[%s155 + $0x18] sm:$0xff] %v238
        $region32: #{tpu_custom_call.1} parent=23 // pred_fallthru
          _
        %s241 = sand.u32 %s73, 1
        %s242 = scalar_lea.sflag [#allocation6], %s241
        %s243 = sand.u32 %s73, 1
        %s244 = smul.addr %s243, 32
        %s245 = scalar_lea.vmem [#allocation7], %s244
        // Predicated region
        $region33: #{tpu_custom_call.1} parent=23 // pred_check
          %p246 = pneg %p83
        $region34: #{tpu_custom_call.1} parent=23 // pred_check_branch
          %248 = sbr.rel (%p246) target = $region36
        $region35: #{tpu_custom_call.1} parent=23 // pred_region
          %s250 = ssub.s32 512, 512
          %251 = vsyncadd %s242, %s250
          %s252 = smul.addr %s28, 4
          %s253 = smul.addr %s27, 4
          %s254 = sadd.s32 %s252, %s253
          %s255 = smul.addr %s254, 128
          %s256 = scalar_lea.hbm %s2, %s255
          %s258 = sshll.u32 %s245, 4
          %s259 = int_to_ptr.vmem [resolvable:$true] %s258
          %261 = dma.vmem_to_hbm [thread:$0]  %s259, 512, %s256, %s242
        $region36: #{tpu_custom_call.1} parent=23 // pred_fallthru
          _
      $region24: #{tpu_custom_call.1} parent=5 // pred_fallthru
        _
      %p262 = scmp.le.s32.totalorder 2, %s18
      // Predicated region
      $region37: #{tpu_custom_call.1} parent=5 // pred_check
        %p263 = pneg %p262
      $region38: #{tpu_custom_call.1} parent=5 // pred_check_branch
        %265 = sbr.rel (%p263) target = $region40
      $region39: #{tpu_custom_call.1} parent=5 // pred_region
        %s266 = ssub.s32 %s18, 2
        // Predicated region
        $region41: #{tpu_custom_call.1} parent=39 // pred_check
          %p267 = pneg %p89
        $region42: #{tpu_custom_call.1} parent=39 // pred_check_branch
          %269 = sbr.rel (%p267) target = $region44
        $region43: #{tpu_custom_call.1} parent=39 // pred_region
          %s270 = sand.u32 %s74, 1
          %s271 = scalar_lea.sflag [#allocation6], %s270
          %s272 = sand.u32 %s74, 1
          %s273 = smul.addr %s272, 32
          %s274 = scalar_lea.vmem [#allocation7], %s273
          %275 = dma.done %s271, 512
        $region44: #{tpu_custom_call.1} parent=39 // pred_fallthru
          _
      $region40: #{tpu_custom_call.1} parent=5 // pred_fallthru
        _
    $region6: #{tpu_custom_call.1} parent=1 // loop_footer
      %s22 = sadd.s32 1, %s18
    $region7: #{tpu_custom_call.1} parent=1 // loop_footer_branch
      %17 = sbr.rel target = $region3
    $region8: #{tpu_custom_call.1} parent=1 // loop_exit
      _
    %276 = vsyncpa [#allocation5], 1
    %s277 = scalar_lea.sflag [#allocation5], 1
    %278 = vsyncpa %s277, 1
    %279 = vsyncpa [#allocation6], 1
    %s280 = scalar_lea.sflag [#allocation6], 1
    %281 = vsyncpa %s280, 1

</llo_original>
